<compile_context>
chip_gen: v6e
topology: v6e:2x2x1
jax: 0.10.0
libtpu: 0.0.40
codegen_flags: <defaults>
</compile_context>

<pallas_src>
import jax
import jax.numpy as jnp
from jax import lax
from jax.experimental import pallas as pl
from jax.experimental.pallas import tpu as pltpu

CONFIDENCE_MARGIN = 5.0
REF_N = 5000                 # number of reference normal samples
LANES = 128
TM_MAX = 2048                # rows per tile: 2048*128*4B = 1 MiB per f32 input tile
_MIN_PALLAS_ELEMS = 8192     # below this, the fused pure-JAX path wins


def _cdiv(a, b):
    return -(-a // b)


def _round_up(x, m):
    return _cdiv(x, m) * m


def _sublane_multiple(dtype):
    # native sublane tiling requirement per element width
    return {1: 32, 2: 16, 4: 8}.get(jnp.dtype(dtype).itemsize, 8)


def _make_kernel(tm, rows, chunk):
    """Kernel over one (tm, 128) row tile of y_pred / y_true.

    Streams the tile in (chunk, 128) sub-slices, accumulating an (8, 128)
    element-wise partial sum (VPU-only). The tiny final reduce + mean runs in JAX.
    """
    n_chunks = tm // chunk
    needs_mask = (rows % tm) != 0      # last grid tile is ragged -> mask OOB rows

    def kernel(stats_ref, yp_ref, yt_ref, out_ref):
        ref_mean = stats_ref[0]        # SMEM f32[2] = [mean(ref), 1/std(ref)]
        inv_std = stats_ref[1]
        tile_row0 = pl.program_id(0) * tm

        def body(j, acc):
            r0 = pl.multiple_of(j * chunk, chunk)
            yp = yp_ref[pl.ds(r0, chunk), :].astype(jnp.float32)
            yt = yt_ref[pl.ds(r0, chunk), :].astype(jnp.float32)
            dev = (yp - ref_mean) * inv_std
            inlier = jnp.abs(dev)
            outlier = jnp.maximum(CONFIDENCE_MARGIN - dev, 0.0)   # relu is already >= 0
            loss = inlier + yt * (outlier - inlier)
            if needs_mask:
                row_ids = (tile_row0 + r0 +
                           lax.broadcasted_iota(jnp.int32, (chunk, LANES), 0))
                loss = jnp.where(row_ids < rows, loss, 0.0)
            # (chunk,128) -> (chunk//8, 8, 128) preserves (8,128) tiles; sum is a vreg add tree.
            return acc + loss.reshape(chunk // 8, 8, LANES).sum(axis=0)

        out_ref[...] = lax.fori_loop(0, n_chunks, body,
                                     jnp.zeros((8, LANES), jnp.float32))

    return kernel


def deviation_loss(y_pred, y_true, ref):
    """y_pred, y_true: any shape (e.g. (N, 1)); ref: (REF_N,) reference normal samples."""
    total = y_pred.size
    assert y_true.size == total

    # Reference statistics hoisted out of the kernel (O(5000) scalars, done once).
    ref = ref.astype(jnp.float32)
    ref_mean = jnp.mean(ref)
    inv_std = 1.0 / jnp.std(ref, ddof=1)          # exact reciprocal, computed once

    yp = y_pred.reshape(-1)
    yt = y_true.reshape(-1)

    # Keep narrow dtypes narrow: cast to f32 *inside* the kernel (free VPU slot),
    # not in the wrapper (which would be an extra full HBM read+write pass).
    if jnp.dtype(yp.dtype) not in (jnp.dtype(jnp.float32), jnp.dtype(jnp.bfloat16)):
        yp = yp.astype(jnp.float32)
    if jnp.dtype(yt.dtype) == jnp.dtype(jnp.bool_):
        yt = yt.astype(jnp.int8)
    elif jnp.dtype(yt.dtype) not in (jnp.dtype(jnp.float32), jnp.dtype(jnp.bfloat16),
                                     jnp.dtype(jnp.int8), jnp.dtype(jnp.uint8),
                                     jnp.dtype(jnp.int32)):
        yt = yt.astype(jnp.float32)

    def elem_loss(p, t):
        dev = (p.astype(jnp.float32) - ref_mean) * inv_std
        inl = jnp.abs(dev)
        outl = jnp.maximum(CONFIDENCE_MARGIN - dev, 0.0)
        return inl + t.astype(jnp.float32) * (outl - inl)

    # Tiny inputs: fixed pallas_call/DMA setup overhead dominates -> pure JAX.
    if total < _MIN_PALLAS_ELEMS:
        return jnp.sum(elem_loss(yp, yt)) / jnp.float32(total)

    # Lane-aligned main slab + tiny (<128 element) pure-JAX tail (no pad copies).
    total_main = (total // LANES) * LANES
    tail = total - total_main
    rows = total_main // LANES

    if tail:
        tail_loss = jnp.sum(elem_loss(yp[total_main:], yt[total_main:]))
        yp_main, yt_main = yp[:total_main], yt[:total_main]
    else:
        tail_loss = jnp.float32(0.0)
        yp_main, yt_main = yp, yt
    yp2 = yp_main.reshape(rows, LANES)
    yt2 = yt_main.reshape(rows, LANES)

    # Tile selection: balanced tiles, >= 2 grid steps whenever splittable (v7x has
    # 2 TensorCores), tm a multiple of the strictest sublane requirement of the dtypes.
    sub = max(_sublane_multiple(yp2.dtype), _sublane_multiple(yt2.dtype))
    n_tiles = _cdiv(rows, TM_MAX)
    if rows > sub:
        n_tiles = max(2, n_tiles)
    tm = min(TM_MAX, max(sub, _round_up(_cdiv(rows, n_tiles), sub)))
    grid = _cdiv(rows, tm)
    chunk = next(c for c in (64, 32, 16, 8) if tm % c == 0)

    stats = jnp.stack([ref_mean, inv_std]).astype(jnp.float32)

    partials = pl.pallas_call(
        _make_kernel(tm, rows, chunk),
        out_shape=jax.ShapeDtypeStruct((grid * 8, LANES), jnp.float32),
        grid_spec=pltpu.PrefetchScalarGridSpec(
            num_scalar_prefetch=0,
            grid=(grid,),
            in_specs=[
                pl.BlockSpec(memory_space=pltpu.MemorySpace.SMEM),   # [mean, 1/std]
                pl.BlockSpec((tm, LANES), lambda i: (i, 0)),          # y_pred row tile
                pl.BlockSpec((tm, LANES), lambda i: (i, 0)),          # y_true row tile
            ],
            out_specs=pl.BlockSpec((8, LANES), lambda i: (i, 0)),     # per-tile partials
        ),
        compiler_params=pltpu.CompilerParams(
            dimension_semantics=("parallel",)),                       # independent tiles
    )(stats, yp2, yt2)

    return (jnp.sum(partials) + tail_loss) / jnp.float32(total)


def deviation_loss_reference(y_pred, y_true, ref):
    """Pure-JAX reference matching the PyTorch forward (given the same ref samples)."""
    ref_mean = jnp.mean(ref)
    ref_std = jnp.std(ref, ddof=1)
    dev = (y_pred.astype(jnp.float32) - ref_mean) / ref_std
    inlier = jnp.abs(dev)
    outlier = jnp.abs(jnp.maximum(CONFIDENCE_MARGIN - dev, 0.0))
    yt = y_true.astype(jnp.float32)
    return jnp.mean((1.0 - yt) * inlier + yt * outlier)


if __name__ == "__main__":
    key = jax.random.PRNGKey(0)
    k_pred, k_true, k_ref = jax.random.split(key, 3)

    # TODO(synk): the torch module samples `ref` inside forward; here we sample the
    # reference normals once in-script and feed the SAME samples to kernel and reference.
    ref = jax.random.normal(k_ref, (REF_N,), dtype=jnp.float32)

    # Kernel path: N not a multiple of 128 -> exercises ragged-tile masking + JAX tail.
    N = 20000
    y_pred = jax.random.normal(k_pred, (N, 1), dtype=jnp.float32) * 2.0
    y_true = (jax.random.uniform(k_true, (N, 1)) < 0.1).astype(jnp.float32)  # ~10% outliers

    out = jax.block_until_ready(deviation_loss(y_pred, y_true, ref))
    expected = deviation_loss_reference(y_pred, y_true, ref)
    assert jnp.allclose(out, expected, rtol=1e-5, atol=1e-5), (out, expected)

    # Narrow-label path: int8 y_true stays int8 all the way into the kernel (less HBM traffic).
    y_true_i8 = y_true.astype(jnp.int8)
    out_i8 = jax.block_until_ready(deviation_loss(y_pred, y_true_i8, ref))
    assert jnp.allclose(out_i8, expected, rtol=1e-5, atol=1e-5), (out_i8, expected)

    # Tiny-input path: short-circuits to the fused pure-JAX implementation.
    Ns = 512
    out_s = jax.block_until_ready(deviation_loss(y_pred[:Ns], y_true[:Ns], ref))
    expected_s = deviation_loss_reference(y_pred[:Ns], y_true[:Ns], ref)
    assert jnp.allclose(out_s, expected_s, rtol=1e-5, atol=1e-5), (out_s, expected_s)

    print("KERNEL_OK")
</pallas_src>

<mosaic_0001>
module attributes {stable_mosaic.version = 11 : i64} {
  func.func @kernel(%arg0: i32, %arg1: memref<2xf32, #tpu.memory_space<smem>>, %arg2: memref<80x128xf32, #tpu.memory_space<vmem>>, %arg3: memref<80x128xf32, #tpu.memory_space<vmem>>, %arg4: memref<8x128xf32, #tpu.memory_space<vmem>>) attributes {dimension_semantics = [#tpu.dimension_semantics<parallel>], iteration_bounds = array<i64: 2>, scalar_prefetch = 0 : i64, scratch_operands = 0 : i64, tpu.core_type = #tpu.core_type<tc>, window_params = [{transform_indices = @transform_0, window_bounds = array<i64: 2>}, {transform_indices = @transform_1, window_bounds = array<i64: 80, 128>}, {transform_indices = @transform_2, window_bounds = array<i64: 80, 128>}, {transform_indices = @transform_3, window_bounds = array<i64: 8, 128>}]} {
    %c0 = arith.constant 0 : index
    %0 = memref.load %arg1[%c0] : memref<2xf32, #tpu.memory_space<smem>>
    %c1 = arith.constant 1 : index
    %1 = memref.load %arg1[%c1] : memref<2xf32, #tpu.memory_space<smem>>
    %c80_i32 = arith.constant 80 : i32
    %2 = arith.muli %arg0, %c80_i32 : i32
    %cst = arith.constant 0.000000e+00 : f32
    %3 = vector.broadcast %cst : f32 to vector<8x128xf32>
    %c0_i32 = arith.constant 0 : i32
    %c5_i32 = arith.constant 5 : i32
    %4 = arith.addi %c0_i32, %c5_i32 : i32
    %c1_i32 = arith.constant 1 : i32
    %5 = scf.for %arg5 = %c0_i32 to %4 step %c1_i32 iter_args(%arg6 = %3) -> (vector<8x128xf32>)  : i32 {
      %c16_i32 = arith.constant 16 : i32
      %7 = arith.muli %arg5, %c16_i32 : i32
      %8 = tpu.assume_multiple %7, 16 : i32
      %9 = arith.index_cast %8 : i32 to index
      %c0_3 = arith.constant 0 : index
      %10 = vector.load %arg2[%9, %c0_3] : memref<80x128xf32, #tpu.memory_space<vmem>>, vector<16x128xf32>
      %11 = arith.index_cast %8 : i32 to index
      %c0_4 = arith.constant 0 : index
      %12 = vector.load %arg3[%11, %c0_4] : memref<80x128xf32, #tpu.memory_space<vmem>>, vector<16x128xf32>
      %13 = vector.broadcast %0 : f32 to vector<16x128xf32>
      %14 = arith.subf %10, %13 : vector<16x128xf32>
      %15 = vector.broadcast %1 : f32 to vector<16x128xf32>
      %16 = arith.mulf %14, %15 : vector<16x128xf32>
      %17 = math.absf %16 : vector<16x128xf32>
      %cst_5 = arith.constant 5.000000e+00 : f32
      %18 = vector.broadcast %cst_5 : f32 to vector<16x128xf32>
      %19 = arith.subf %18, %16 : vector<16x128xf32>
      %cst_6 = arith.constant 0.000000e+00 : f32
      %20 = vector.broadcast %cst_6 : f32 to vector<16x128xf32>
      %21 = arith.maximumf %19, %20 : vector<16x128xf32>
      %22 = arith.subf %21, %17 : vector<16x128xf32>
      %23 = arith.mulf %12, %22 : vector<16x128xf32>
      %24 = arith.addf %17, %23 : vector<16x128xf32>
      %25 = arith.addi %2, %8 : i32
      %26 = tpu.iota {dimensions = array<i32: 0>} : vector<16x128xi32>
      %27 = vector.broadcast %25 : i32 to vector<16x128xi32>
      %28 = arith.addi %27, %26 : vector<16x128xi32>
      %c156_i32 = arith.constant 156 : i32
      %29 = vector.broadcast %c156_i32 : i32 to vector<16x128xi32>
      %30 = arith.cmpi slt, %28, %29 : vector<16x128xi32>
      %cst_7 = arith.constant 0.000000e+00 : f32
      %31 = vector.broadcast %cst_7 : f32 to vector<16x128xf32>
      %32 = arith.select %30, %24, %31 : vector<16x128xi1>, vector<16x128xf32>
      %33 = vector.shape_cast %32 : vector<16x128xf32> to vector<2x8x128xf32>
      %cst_8 = arith.constant dense<0.000000e+00> : vector<8x128xf32>
      %34 = vector.multi_reduction <add>, %33, %cst_8 [0] : vector<2x8x128xf32> to vector<8x128xf32>
      %35 = arith.addf %arg6, %34 : vector<8x128xf32>
      scf.yield %35 : vector<8x128xf32>
    }
    %c5_i32_0 = arith.constant 5 : i32
    %c0_1 = arith.constant 0 : index
    %c0_2 = arith.constant 0 : index
    %6 = vector.load %arg4[%c0_1, %c0_2] : memref<8x128xf32, #tpu.memory_space<vmem>>, vector<8x128xf32>
    tpu.vector_store %arg4[%c0_1, %c0_2], %5 {strides = array<i32>} : memref<8x128xf32, #tpu.memory_space<vmem>>, vector<8x128xf32>,
    return
  }
  func.func @transform_0(%arg0: i32) -> i32 {
    %c0_i32 = arith.constant 0 : i32
    %c0_i32_0 = arith.constant 0 : i32
    return %c0_i32 : i32
  }
  func.func @transform_1(%arg0: i32) -> (i32, i32) {
    %c0_i32 = arith.constant 0 : i32
    %c0_i32_0 = arith.constant 0 : i32
    return %arg0, %c0_i32 : i32, i32
  }
  func.func @transform_2(%arg0: i32) -> (i32, i32) {
    %c0_i32 = arith.constant 0 : i32
    %c0_i32_0 = arith.constant 0 : i32
    return %arg0, %c0_i32 : i32, i32
  }
  func.func @transform_3(%arg0: i32) -> (i32, i32) {
    %c0_i32 = arith.constant 0 : i32
    %c0_i32_0 = arith.constant 0 : i32
    return %arg0, %c0_i32 : i32, i32
  }
}

</mosaic_0001>

<llo_original>
// kernel: tpu_custom_call.1
$region0: #{tpu_custom_call.1}
  #allocation0 [shape = 'u32[]', space=smem, size = 0x4, offset = 0x4, fixed_abs, tag = 'smem constant byte address 0x4 - core index']
  #allocation1 [shape = 'u32[144,128]{1,0:T(1,128)}', space=vmem, size = 0x12000, scoped, tag = 'internal scratch']
  %s0 = inlined_call_operand.hbm [shape: f32[2], index: 0, kind: input, shape index: {}]
  %s1 = inlined_call_operand.hbm [shape: f32[156,128], index: 1, kind: input, shape index: {}]
  %s2 = inlined_call_operand.hbm [shape: f32[156,128], index: 2, kind: input, shape index: {}]
  %s3 = inlined_call_operand.hbm [shape: f32[16,128], index: 3, kind: output, shape index: {}]
  %s4 = sld [smem:[#allocation0]]
  $region64: #{tpu_custom_call.1} parent=0
    _
  %s6 = ssub.s32 1, %s4
  %s7 = scalar_select 0, %s6, %s4
  $region1: #{tpu_custom_call.1} parent=0
    #allocation2 [shape = 'u8[512]{0}', space=smem, size = 0x200, scoped, tag = 'input window, operand 0, single buffered']
    #allocation3 [shape = 's32[2]{0}', space=sflag, size = 0x8, scoped, tag = 'scoped memory for tpu_custom_call.1']
    #allocation4 [shape = 's32[2]{0}', space=sflag, size = 0x8, scoped, tag = 'scoped memory for tpu_custom_call.1']
    #allocation5 [shape = 's32[2]{0}', space=sflag, size = 0x8, scoped, tag = 'scoped memory for tpu_custom_call.1']
    #allocation6 [shape = 'u8[81920]{0}', space=vmem, size = 0x14000, scoped, tag = 'input window, operand 1']
    #allocation7 [shape = 'u8[81920]{0}', space=vmem, size = 0x14000, scoped, tag = 'input window, operand 2']
    #allocation8 [shape = 's32[2]{0}', space=sflag, size = 0x8, scoped, tag = 'scoped memory for tpu_custom_call.1']
    #allocation9 [shape = 'u8[8192]{0}', space=vmem, size = 0x2000, scoped, tag = 'output window, operand 0']
    %8 = vsyncpa [#allocation5], 0
    %9 = vsyncpa [#allocation3], 0
    %s10 = scalar_lea.sflag [#allocation3], 1
    %11 = vsyncpa %s10, 0
    %12 = vsyncpa [#allocation8], 0
    %s13 = scalar_lea.sflag [#allocation8], 1
    %14 = vsyncpa %s13, 0
    %15 = vsyncpa [#allocation4], 0
    %s16 = scalar_lea.sflag [#allocation4], 1
    %17 = vsyncpa %s16, 0
    loop: start=0, step=1, limit=4
    $region2: #{tpu_custom_call.1} parent=1 // loop_pre_header
      _
    $region3: #{tpu_custom_call.1} parent=1 // loop_header
      %s19 = sphi 0, %s23
      %p20 = scmp.ge.s32.totalorder %s19, 4
      %s27 = sphi 0, %s27
      %s29 = sphi 0, %s27
      %s30 = sphi 0, %s29
      %s44 = sphi 0, %s30
      %s50 = sphi 0, %s52
      %s53 = sphi 0, %s50
      %s54 = sphi 0, %s53
      %s70 = sphi 0, %s54
      %s76 = sphi 0, %s78
      %s79 = sphi 0, %s76
      %s80 = sphi 0, %s79
      %s96 = sphi 0, %s80
      %s102 = sphi 0, %s104
      %s105 = sphi 0, %s102
      %s106 = sphi 0, %s105
      %s122 = sphi 0, %s106
    $region4: #{tpu_custom_call.1} parent=1 // loop_header_branch
      %22 = sbr.rel (%p20) target = $region8
    $region5: #{tpu_custom_call.1} parent=1 // loop_body
      %s24 = ssub.s32 %s19, 1
      %s25 = ssub.s32 %s19, 2
      %s26 = sadd.s32 %s19, 1
      %s28 = sadd.s32 %s27, 1
      %p31 = scmp.eq.s32.totalorder %s19, 1
      %p32 = scmp.ne.s32.totalorder %s27, %s29
      %p33 = scmp.eq.s32.totalorder %s19, 0
      %p34 = por %p32, %p33
      %p35 = scmp.ne.s32.totalorder %s27, %s29
      %p36 = scmp.eq.s32.totalorder %s24, 1
      %p37 = por %p35, %p36
      %p38 = scmp.ne.s32.totalorder %s29, %s30
      %p39 = scmp.eq.s32.totalorder %s24, 0
      %p40 = por %p38, %p39
      %p41 = scmp.ne.s32.totalorder %s29, %s30
      %p42 = scmp.eq.s32.totalorder %s25, 1
      %p43 = por %p41, %p42
      %p45 = scmp.ne.s32.totalorder %s30, %s44
      %p46 = scmp.eq.s32.totalorder %s25, 0
      %p47 = por %p45, %p46
      %s48 = ssub.s32 %s19, %s26
      %p49 = scmp.eq.s32.totalorder %s48, 0
      %s51 = sadd.s32 %s50, 1
      %s52 = scalar_select %p49, %s50, %s51
      %p55 = pneg %p49
      %p56 = scmp.eq.s32.totalorder %s19, 1
      %p57 = por %p55, %p56
      %p58 = scmp.ne.s32.totalorder %s50, %s53
      %p59 = scmp.eq.s32.totalorder %s19, 0
      %p60 = por %p58, %p59
      %p61 = scmp.ne.s32.totalorder %s50, %s53
      %p62 = scmp.eq.s32.totalorder %s24, 1
      %p63 = por %p61, %p62
      %p64 = scmp.ne.s32.totalorder %s53, %s54
      %p65 = scmp.eq.s32.totalorder %s24, 0
      %p66 = por %p64, %p65
      %p67 = scmp.ne.s32.totalorder %s53, %s54
      %p68 = scmp.eq.s32.totalorder %s25, 1
      %p69 = por %p67, %p68
      %p71 = scmp.ne.s32.totalorder %s54, %s70
      %p72 = scmp.eq.s32.totalorder %s25, 0
      %p73 = por %p71, %p72
      %s74 = ssub.s32 %s19, %s26
      %p75 = scmp.eq.s32.totalorder %s74, 0
      %s77 = sadd.s32 %s76, 1
      %s78 = scalar_select %p75, %s76, %s77
      %p81 = pneg %p75
      %p82 = scmp.eq.s32.totalorder %s19, 1
      %p83 = por %p81, %p82
      %p84 = scmp.ne.s32.totalorder %s76, %s79
      %p85 = scmp.eq.s32.totalorder %s19, 0
      %p86 = por %p84, %p85
      %p87 = scmp.ne.s32.totalorder %s76, %s79
      %p88 = scmp.eq.s32.totalorder %s24, 1
      %p89 = por %p87, %p88
      %p90 = scmp.ne.s32.totalorder %s79, %s80
      %p91 = scmp.eq.s32.totalorder %s24, 0
      %p92 = por %p90, %p91
      %p93 = scmp.ne.s32.totalorder %s79, %s80
      %p94 = scmp.eq.s32.totalorder %s25, 1
      %p95 = por %p93, %p94
      %p97 = scmp.ne.s32.totalorder %s80, %s96
      %p98 = scmp.eq.s32.totalorder %s25, 0
      %p99 = por %p97, %p98
      %s100 = ssub.s32 %s19, %s26
      %p101 = scmp.eq.s32.totalorder %s100, 0
      %s103 = sadd.s32 %s102, 1
      %s104 = scalar_select %p101, %s102, %s103
      %p107 = pneg %p101
      %p108 = scmp.eq.s32.totalorder %s19, 1
      %p109 = por %p107, %p108
      %p110 = scmp.ne.s32.totalorder %s102, %s105
      %p111 = scmp.eq.s32.totalorder %s19, 0
      %p112 = por %p110, %p111
      %p113 = scmp.ne.s32.totalorder %s102, %s105
      %p114 = scmp.eq.s32.totalorder %s24, 1
      %p115 = por %p113, %p114
      %p116 = scmp.ne.s32.totalorder %s105, %s106
      %p117 = scmp.eq.s32.totalorder %s24, 0
      %p118 = por %p116, %p117
      %p119 = scmp.ne.s32.totalorder %s105, %s106
      %p120 = scmp.eq.s32.totalorder %s25, 1
      %p121 = por %p119, %p120
      %p123 = scmp.ne.s32.totalorder %s106, %s122
      %p124 = scmp.eq.s32.totalorder %s25, 0
      %p125 = por %p123, %p124
      %p126 = scmp.le.s32.totalorder 1, %s19
      %p127 = scmp.lt.s32.totalorder %s19, 3
      %p128 = pnand %p126, %p127
      %p129 = pneg %p128
      // Predicated region
      $region9: #{tpu_custom_call.1} parent=5 // pred_check
        _
      $region10: #{tpu_custom_call.1} parent=5 // pred_check_branch
        %131 = sbr.rel (%p128) target = $region12
      $region11: #{tpu_custom_call.1} parent=5 // pred_region
        %s132 = ssub.s32 %s19, 1
        // Predicated region
        $region13: #{tpu_custom_call.1} parent=11 // pred_check
          %p133 = pneg %p40
        $region14: #{tpu_custom_call.1} parent=11 // pred_check_branch
          %135 = sbr.rel (%p133) target = $region16
        $region15: #{tpu_custom_call.1} parent=11 // pred_region
          %s137 = ssub.s32 16, 16
          %138 = vsyncadd [#allocation5], %s137
          %141 = dma.hbm_to_smem %s0, 16, [#allocation2], [#allocation5]
        $region16: #{tpu_custom_call.1} parent=11 // pred_fallthru
          _
      $region12: #{tpu_custom_call.1} parent=5 // pred_fallthru
        _
      %p142 = scmp.lt.s32.totalorder %s19, 2
      // Predicated region
      $region17: #{tpu_custom_call.1} parent=5 // pred_check
        %p143 = pneg %p142
      $region18: #{tpu_custom_call.1} parent=5 // pred_check_branch
        %145 = sbr.rel (%p143) target = $region20
      $region19: #{tpu_custom_call.1} parent=5 // pred_region
        // Predicated region
        $region21: #{tpu_custom_call.1} parent=19 // pred_check
          %p146 = pneg %p60
        $region22: #{tpu_custom_call.1} parent=19 // pred_check_branch
          %148 = sbr.rel (%p146) target = $region24
        $region23: #{tpu_custom_call.1} parent=19 // pred_region
          %s149 = sand.u32 %s50, 1
          %s150 = scalar_lea.sflag [#allocation3], %s149
          %s151 = sand.u32 %s50, 1
          %s152 = smul.addr %s151, 80
          %s153 = scalar_lea.vmem [#allocation6], %s152
          %s154 = smul.u32 10, %s19
          %s156 = ssub.s32 1280, 1280
          %157 = vsyncadd %s150, %s156
          %s158 = smul.addr %s154, 128
          %s159 = scalar_lea.hbm %s1, %s158
          %s160 = sshll.u32 %s153, 4
          %s161 = int_to_ptr.vmem [resolvable:$true] %s160
          %166 = dma.hbm_to_vmem [thread:$0]  %s159, 1280, %s161, %s150, 128, 128, 8
        $region24: #{tpu_custom_call.1} parent=19 // pred_fallthru
          _
        // Predicated region
        $region25: #{tpu_custom_call.1} parent=19 // pred_check
          %p167 = pneg %p86
        $region26: #{tpu_custom_call.1} parent=19 // pred_check_branch
          %169 = sbr.rel (%p167) target = $region28
        $region27: #{tpu_custom_call.1} parent=19 // pred_region
          %s170 = sand.u32 %s76, 1
          %s171 = scalar_lea.sflag [#allocation8], %s170
          %s172 = sand.u32 %s76, 1
          %s173 = smul.addr %s172, 80
          %s174 = scalar_lea.vmem [#allocation7], %s173
          %s175 = smul.u32 10, %s19
          %s177 = ssub.s32 1280, 1280
          %178 = vsyncadd %s171, %s177
          %s179 = smul.addr %s175, 128
          %s180 = scalar_lea.hbm %s2, %s179
          %s181 = sshll.u32 %s174, 4
          %s182 = int_to_ptr.vmem [resolvable:$true] %s181
          %187 = dma.hbm_to_vmem [thread:$0]  %s180, 1280, %s182, %s171, 128, 128, 8
        $region28: #{tpu_custom_call.1} parent=19 // pred_fallthru
          _
      $region20: #{tpu_custom_call.1} parent=5 // pred_fallthru
        _
      %p188 = scmp.le.s32.totalorder 1, %s19
      %p189 = scmp.lt.s32.totalorder %s19, 3
      %p190 = pnand %p188, %p189
      %p191 = pneg %p190
      // Predicated region
      $region29: #{tpu_custom_call.1} parent=5 // pred_check
        _
      $region30: #{tpu_custom_call.1} parent=5 // pred_check_branch
        %193 = sbr.rel (%p190) target = $region32
      $region31: #{tpu_custom_call.1} parent=5 // pred_region
        %s194 = ssub.s32 %s19, 1
        // Predicated region
        $region33: #{tpu_custom_call.1} parent=31 // pred_check
          %p195 = pneg %p40
        $region34: #{tpu_custom_call.1} parent=31 // pred_check_branch
          %197 = sbr.rel (%p195) target = $region36
        $region35: #{tpu_custom_call.1} parent=31 // pred_region
          %198 = dma.done [#allocation5], 16
        $region36: #{tpu_custom_call.1} parent=31 // pred_fallthru
          _
        %s199 = sand.u32 %s53, 1
        %s200 = scalar_lea.sflag [#allocation3], %s199
        %s201 = sand.u32 %s53, 1
        %s202 = smul.addr %s201, 80
        %s203 = scalar_lea.vmem [#allocation6], %s202
        // Predicated region
        $region37: #{tpu_custom_call.1} parent=31 // pred_check
          %p204 = pneg %p66
        $region38: #{tpu_custom_call.1} parent=31 // pred_check_branch
          %206 = sbr.rel (%p204) target = $region40
        $region39: #{tpu_custom_call.1} parent=31 // pred_region
          %207 = dma.done %s200, 1280
        $region40: #{tpu_custom_call.1} parent=31 // pred_fallthru
          _
        %s208 = sand.u32 %s79, 1
        %s209 = scalar_lea.sflag [#allocation8], %s208
        %s210 = sand.u32 %s79, 1
        %s211 = smul.addr %s210, 80
        %s212 = scalar_lea.vmem [#allocation7], %s211
        // Predicated region
        $region41: #{tpu_custom_call.1} parent=31 // pred_check
          %p213 = pneg %p92
        $region42: #{tpu_custom_call.1} parent=31 // pred_check_branch
          %215 = sbr.rel (%p213) target = $region44
        $region43: #{tpu_custom_call.1} parent=31 // pred_region
          %216 = dma.done %s209, 1280
        $region44: #{tpu_custom_call.1} parent=31 // pred_fallthru
          _
        %217 = sfence
        %p218 = pneg %p40
        %p219 = pneg %p37
        %s220 = sand.u32 %s53, 1
        %s221 = scalar_lea.sflag [#allocation3], %s220
        %s222 = sand.u32 %s53, 1
        %s223 = smul.addr %s222, 80
        %s224 = scalar_lea.vmem [#allocation6], %s223
        %p225 = pneg %p66
        %p226 = pneg %p63
        %s227 = sand.u32 %s79, 1
        %s228 = scalar_lea.sflag [#allocation8], %s227
        %s229 = sand.u32 %s79, 1
        %s230 = smul.addr %s229, 80
        %s231 = scalar_lea.vmem [#allocation7], %s230
        %p232 = pneg %p92
        %p233 = pneg %p89
        %p234 = pneg %p118
        %p235 = pneg %p115
        %s236 = sand.u32 %s105, 1
        %s237 = scalar_lea.sflag [#allocation4], %s236
        %s238 = sand.u32 %s105, 1
        %s239 = smul.addr %s238, 8
        %s240 = scalar_lea.vmem [#allocation9], %s239
        %s241 = smul.u32 10, %s24
        %s242 = smul.u32 10, %s24
        %s243 = sld [smem:[#allocation2]]
        %s244 = sld [smem:[#allocation2 + $0x1]]
        %s245 = smul.u32 %s24, 80
        loop: start=0, step=1, limit=5
        $region45: #{tpu_custom_call.1} parent=31 // loop_pre_header
          _
        $region46: #{tpu_custom_call.1} parent=31 // loop_header
          %s247 = sphi 0, %s251
          %p248 = scmp.ge.s32.totalorder %s247, 5
          %v252 = vphi 0.0, %v290
        $region47: #{tpu_custom_call.1} parent=31 // loop_header_branch
          %250 = sbr.rel (%p248) target = $region51
        $region48: #{tpu_custom_call.1} parent=31 // loop_body
          %s253 = smul.u32 %s247, 16
          %s254 = scalar_lea.vmem %s203, %s253 [#allocation6]
          %v255 = vld [vmem:[%s254] sm:$0xff]
          %v256 = vld [vmem:[%s254 + $0x8] sm:$0xff]
          %s257 = scalar_lea.vmem %s212, %s253 [#allocation7]
          %v258 = vld [vmem:[%s257] sm:$0xff]
          %v259 = vld [vmem:[%s257 + $0x8] sm:$0xff]
          %v260 = vstv %s243
          %v261 = vsub.f32 %v255, %v260
          %v262 = vsub.f32 %v256, %v260
          %v263 = vstv %s244
          %v264 = vmul.f32 %v261, %v263
          %v265 = vmul.f32 %v262, %v263
          %v266 = vand.u32 2147483647, %v264
          %v267 = vand.u32 2147483647, %v265
          %v268 = vsub.f32 5.0, %v264
          %v269 = vsub.f32 5.0, %v265
          %v270 = vmax.f32 %v268, 0.0
          %v271 = vmax.f32 %v269, 0.0
          %v272 = vsub.f32 %v270, %v266
          %v273 = vsub.f32 %v271, %v267
          %v274 = vmul.f32 %v258, %v272
          %v275 = vmul.f32 %v259, %v273
          %v276 = vadd.f32 %v266, %v274
          %v277 = vadd.f32 %v267, %v275
          %s278 = sadd.s32 %s245, %s253
          %v279 = vlaneseq
          %v280 = vshrl.u32 %v279, 7
          %v281 = vadd.s32 %v280, 8
          %v282 = vstv %s278
          %v283 = vadd.s32 %v282, %v280
          %v284 = vadd.s32 %v282, %v281
          %vm285 = vcmp.lt.s32.totalorder %v283, 156
          %vm286 = vcmp.lt.s32.totalorder %v284, 156
          %v287 = vsel %vm285, %v276, 0.0
          %v288 = vsel %vm286, %v277, 0.0
          %v289 = vadd.f32 %v287, %v288
          %v290 = vadd.f32 %v252, %v289
        $region49: #{tpu_custom_call.1} parent=31 // loop_footer
          %s251 = sadd.s32 1, %s247
        $region50: #{tpu_custom_call.1} parent=31 // loop_footer_branch
          %246 = sbr.rel target = $region46
        $region51: #{tpu_custom_call.1} parent=31 // loop_exit
          _
        %291 = vst [vmem:[%s240] sm:$0xff] %v252
        %s292 = sand.u32 %s105, 1
        %s293 = scalar_lea.sflag [#allocation4], %s292
        %s294 = sand.u32 %s105, 1
        %s295 = smul.addr %s294, 8
        %s296 = scalar_lea.vmem [#allocation9], %s295
        // Predicated region
        $region52: #{tpu_custom_call.1} parent=31 // pred_check
          %p297 = pneg %p115
        $region53: #{tpu_custom_call.1} parent=31 // pred_check_branch
          %299 = sbr.rel (%p297) target = $region55
        $region54: #{tpu_custom_call.1} parent=31 // pred_region
          %s301 = ssub.s32 128, 128
          %302 = vsyncadd %s293, %s301
          %s303 = smul.addr %s24, 128
          %s304 = scalar_lea.hbm %s3, %s303
          %s306 = sshll.u32 %s296, 4
          %s307 = int_to_ptr.vmem [resolvable:$true] %s306
          %309 = dma.vmem_to_hbm [thread:$0]  %s307, 128, %s304, %s293
        $region55: #{tpu_custom_call.1} parent=31 // pred_fallthru
          _
      $region32: #{tpu_custom_call.1} parent=5 // pred_fallthru
        _
      %p310 = scmp.le.s32.totalorder 2, %s19
      // Predicated region
      $region56: #{tpu_custom_call.1} parent=5 // pred_check
        %p311 = pneg %p310
      $region57: #{tpu_custom_call.1} parent=5 // pred_check_branch
        %313 = sbr.rel (%p311) target = $region59
      $region58: #{tpu_custom_call.1} parent=5 // pred_region
        %s314 = ssub.s32 %s19, 2
        // Predicated region
        $region60: #{tpu_custom_call.1} parent=58 // pred_check
          %p315 = pneg %p121
        $region61: #{tpu_custom_call.1} parent=58 // pred_check_branch
          %317 = sbr.rel (%p315) target = $region63
        $region62: #{tpu_custom_call.1} parent=58 // pred_region
          %s318 = sand.u32 %s106, 1
          %s319 = scalar_lea.sflag [#allocation4], %s318
          %s320 = sand.u32 %s106, 1
          %s321 = smul.addr %s320, 8
          %s322 = scalar_lea.vmem [#allocation9], %s321
          %323 = dma.done %s319, 128
        $region63: #{tpu_custom_call.1} parent=58 // pred_fallthru
          _
      $region59: #{tpu_custom_call.1} parent=5 // pred_fallthru
        _
    $region6: #{tpu_custom_call.1} parent=1 // loop_footer
      %s23 = sadd.s32 1, %s19
    $region7: #{tpu_custom_call.1} parent=1 // loop_footer_branch
      %18 = sbr.rel target = $region3
    $region8: #{tpu_custom_call.1} parent=1 // loop_exit
      _
    %324 = vsyncpa [#allocation3], 1
    %s325 = scalar_lea.sflag [#allocation3], 1
    %326 = vsyncpa %s325, 1
    %327 = vsyncpa [#allocation8], 1
    %s328 = scalar_lea.sflag [#allocation8], 1
    %329 = vsyncpa %s328, 1
    %330 = vsyncpa [#allocation4], 1
    %s331 = scalar_lea.sflag [#allocation4], 1
    %332 = vsyncpa %s331, 1
    %333 = vsyncpa [#allocation5], 1
    %s334 = scalar_lea.sflag [#allocation5], 1
    %335 = vsyncpa %s334, 1

</llo_original>
